<compile_context>
chip_gen: v7x
topology: tpu7x:2x2x1
jax: 0.10.0
libtpu: 0.0.40
codegen_flags: <defaults>
</compile_context>

<pallas_src>
import jax
import jax.numpy as jnp
from jax.experimental import pallas as pl
from jax.experimental.pallas import tpu as pltpu


def identical_pool(x: jax.Array, batch: jax.Array) -> jax.Array:
    """Identity pooling: returns x unchanged (batch ignored, as in PyTorch).

    Optimal implementation: no kernel, no HBM read/write.
    """
    del batch  # unused by IdenticalPool.forward
    return x


def _split_leading(lead: int, align: int, max_chunks: int):
    """Split [0, lead) into <= max_chunks contiguous slices aligned to `align`."""
    units = -(-lead // align)  # cdiv
    n_chunks = max(1, min(max_chunks, units))
    base, rem = divmod(units, n_chunks)
    starts, sizes = [], []
    u = 0
    for c in range(n_chunks):
        cu = base + (1 if c < rem else 0)
        start = u * align
        size = min(cu * align, lead - start)
        if size > 0:
            starts.append(start)
            sizes.append(size)
        u += cu
    return starts, sizes


def _make_hbm_copy_kernel(starts, sizes, n_inflight):
    """Direct HBM->HBM chunked memcpy with up to `n_inflight` DMAs in flight."""
    n_chunks = len(starts)

    def kernel(x_hbm, o_hbm, sem):
        def chunk_copy(c):
            s, z = starts[c], sizes[c]
            return pltpu.make_async_copy(
                x_hbm.at[pl.ds(s, z)],
                o_hbm.at[pl.ds(s, z)],
                sem.at[c % n_inflight],
            )

        # Prime the pipeline: issue the first `n_inflight` chunk DMAs.
        for c in range(min(n_inflight, n_chunks)):
            chunk_copy(c).start()
        # Retire chunks in order; each retirement frees a semaphore slot that
        # is immediately reused to launch the next chunk.
        for c in range(n_chunks):
            chunk_copy(c).wait()
            nxt = c + n_inflight
            if nxt < n_chunks:
                chunk_copy(nxt).start()

    return kernel


def identical_pool_copy(
    x: jax.Array,
    batch: jax.Array,
    *,
    max_inflight: int = 4,
    max_chunks: int = 8,
) -> jax.Array:
    """Identity pooling that materializes a fresh output buffer via Pallas.

    Implemented as a direct HBM->HBM DMA (no VMEM staging, no grid).
    Use only when a distinct output allocation is actually required;
    otherwise prefer `identical_pool` (zero-cost) or `jnp.copy(x)`.
    """
    del batch  # unused by IdenticalPool.forward

    if x.size == 0:
        return x  # nothing to move

    orig_shape = x.shape
    # Scalars can't be sliced; give them a rank-1 view (free for a 0-d array).
    x_work = x.reshape((1,)) if x.ndim == 0 else x
    lead = x_work.shape[0]

    itemsize = jnp.dtype(x.dtype).itemsize
    # Sublane packing per element width (f32 -> 8, bf16 -> 16, int8/fp8 -> 32):
    # aligning chunk boundaries to this keeps each DMA tile-aligned in HBM.
    sublane_pack = {4: 8, 2: 16, 1: 32}.get(itemsize, 8)

    starts, sizes = _split_leading(lead, sublane_pack, max_chunks)
    n_inflight = max(1, min(max_inflight, len(starts)))

    kernel = _make_hbm_copy_kernel(starts, sizes, n_inflight)

    cost = pl.CostEstimate(
        flops=0,
        transcendentals=0,
        bytes_accessed=2 * x.size * itemsize,  # read + write
    )

    out = pl.pallas_call(
        kernel,
        out_shape=jax.ShapeDtypeStruct(x_work.shape, x.dtype),
        in_specs=[pl.BlockSpec(memory_space=pl.ANY)],   # raw HBM ref, no auto-DMA
        out_specs=pl.BlockSpec(memory_space=pl.ANY),    # raw HBM ref, no auto-DMA
        scratch_shapes=[pltpu.SemaphoreType.DMA((n_inflight,))],
        cost_estimate=cost,
    )(x_work)

    return out.reshape(orig_shape)


if __name__ == "__main__":
    key = jax.random.PRNGKey(0)
    kx, kb = jax.random.split(key)

    num_nodes, hidden = 16, 32          # small synthetic graph-node embeddings
    x = jax.random.normal(kx, (num_nodes, hidden), dtype=jnp.float32)
    # batch: graph assignment per node (2 graphs), unused by identity pooling.
    batch = jax.random.randint(kb, (num_nodes,), 0, 2, dtype=jnp.int32)

    # Fast path: zero-copy identity (the recommended implementation).
    out_fast = identical_pool(x, batch)
    jax.block_until_ready(out_fast)
    assert out_fast.shape == x.shape and out_fast.dtype == x.dtype
    assert bool(jnp.all(out_fast == x))

    # Pallas HBM->HBM DMA copy path (when a materialized output is required).
    out_copy = identical_pool_copy(x, batch)
    jax.block_until_ready(out_copy)
    assert out_copy.shape == x.shape and out_copy.dtype == x.dtype
    assert bool(jnp.all(out_copy == x))

    # Robustness check: shape whose dims are not multiples of (8, 128).
    x_odd = jax.random.normal(kx, (13, 40), dtype=jnp.float32)
    out_odd = identical_pool_copy(x_odd, batch[:13])
    jax.block_until_ready(out_odd)
    assert out_odd.shape == x_odd.shape and bool(jnp.all(out_odd == x_odd))

    print("KERNEL_OK")
</pallas_src>

<mosaic_0001>
module attributes {stable_mosaic.version = 11 : i64} {
  func.func @kernel(%arg0: memref<16x32xf32, #tpu.memory_space<any>>, %arg1: memref<16x32xf32, #tpu.memory_space<any>>, %arg2: memref<2x!tpu.dma_semaphore, #tpu.memory_space<semaphore_mem>>) attributes {dimension_semantics = [], scalar_prefetch = 0 : i64, scratch_operands = 1 : i64, tpu.core_type = #tpu.core_type<tc>} {
    %c0_i32 = arith.constant 0 : i32
    %c0_i32_0 = arith.constant 0 : i32
    %c0_i32_1 = arith.constant 0 : i32
    %0 = tpu.memref_slice %arg0[%c0_i32_0, %c0_i32_1] : memref<16x32xf32, #tpu.memory_space<any>> -> memref<8x32xf32, #tpu.memory_space<any>>
    %c0_i32_2 = arith.constant 0 : i32
    %c0_i32_3 = arith.constant 0 : i32
    %1 = tpu.memref_slice %arg1[%c0_i32_2, %c0_i32_3] : memref<16x32xf32, #tpu.memory_space<any>> -> memref<8x32xf32, #tpu.memory_space<any>>
    %2 = tpu.memref_slice %arg2[%c0_i32] : memref<2x!tpu.dma_semaphore, #tpu.memory_space<semaphore_mem>> -> memref<1x!tpu.dma_semaphore, #tpu.memory_space<semaphore_mem>>
    %3 = tpu.memref_squeeze %2 : memref<1x!tpu.dma_semaphore, #tpu.memory_space<semaphore_mem>> -> memref<!tpu.dma_semaphore, #tpu.memory_space<semaphore_mem>>
    tpu.enqueue_dma source(%0 : memref<8x32xf32, #tpu.memory_space<any>>) target(%1 : memref<8x32xf32, #tpu.memory_space<any>>) target_semaphore(%3 : memref<!tpu.dma_semaphore, #tpu.memory_space<semaphore_mem>>)
    %c1_i32 = arith.constant 1 : i32
    %c8_i32 = arith.constant 8 : i32
    %c0_i32_4 = arith.constant 0 : i32
    %4 = tpu.memref_slice %arg0[%c8_i32, %c0_i32_4] : memref<16x32xf32, #tpu.memory_space<any>> -> memref<8x32xf32, #tpu.memory_space<any>>
    %c8_i32_5 = arith.constant 8 : i32
    %c0_i32_6 = arith.constant 0 : i32
    %5 = tpu.memref_slice %arg1[%c8_i32_5, %c0_i32_6] : memref<16x32xf32, #tpu.memory_space<any>> -> memref<8x32xf32, #tpu.memory_space<any>>
    %6 = tpu.memref_slice %arg2[%c1_i32] : memref<2x!tpu.dma_semaphore, #tpu.memory_space<semaphore_mem>> -> memref<1x!tpu.dma_semaphore, #tpu.memory_space<semaphore_mem>>
    %7 = tpu.memref_squeeze %6 : memref<1x!tpu.dma_semaphore, #tpu.memory_space<semaphore_mem>> -> memref<!tpu.dma_semaphore, #tpu.memory_space<semaphore_mem>>
    tpu.enqueue_dma source(%4 : memref<8x32xf32, #tpu.memory_space<any>>) target(%5 : memref<8x32xf32, #tpu.memory_space<any>>) target_semaphore(%7 : memref<!tpu.dma_semaphore, #tpu.memory_space<semaphore_mem>>)
    %c0_i32_7 = arith.constant 0 : i32
    %c0_i32_8 = arith.constant 0 : i32
    %c0_i32_9 = arith.constant 0 : i32
    %8 = tpu.memref_slice %arg0[%c0_i32_8, %c0_i32_9] : memref<16x32xf32, #tpu.memory_space<any>> -> memref<8x32xf32, #tpu.memory_space<any>>
    %c0_i32_10 = arith.constant 0 : i32
    %c0_i32_11 = arith.constant 0 : i32
    %9 = tpu.memref_slice %arg1[%c0_i32_10, %c0_i32_11] : memref<16x32xf32, #tpu.memory_space<any>> -> memref<8x32xf32, #tpu.memory_space<any>>
    %10 = tpu.memref_slice %arg2[%c0_i32_7] : memref<2x!tpu.dma_semaphore, #tpu.memory_space<semaphore_mem>> -> memref<1x!tpu.dma_semaphore, #tpu.memory_space<semaphore_mem>>
    %11 = tpu.memref_squeeze %10 : memref<1x!tpu.dma_semaphore, #tpu.memory_space<semaphore_mem>> -> memref<!tpu.dma_semaphore, #tpu.memory_space<semaphore_mem>>
    tpu.wait_dma2 semaphore(%11 : memref<!tpu.dma_semaphore, #tpu.memory_space<semaphore_mem>>) src(%8 : memref<8x32xf32, #tpu.memory_space<any>>) dst(%9 : memref<8x32xf32, #tpu.memory_space<any>>)
    %c1_i32_12 = arith.constant 1 : i32
    %c8_i32_13 = arith.constant 8 : i32
    %c0_i32_14 = arith.constant 0 : i32
    %12 = tpu.memref_slice %arg0[%c8_i32_13, %c0_i32_14] : memref<16x32xf32, #tpu.memory_space<any>> -> memref<8x32xf32, #tpu.memory_space<any>>
    %c8_i32_15 = arith.constant 8 : i32
    %c0_i32_16 = arith.constant 0 : i32
    %13 = tpu.memref_slice %arg1[%c8_i32_15, %c0_i32_16] : memref<16x32xf32, #tpu.memory_space<any>> -> memref<8x32xf32, #tpu.memory_space<any>>
    %14 = tpu.memref_slice %arg2[%c1_i32_12] : memref<2x!tpu.dma_semaphore, #tpu.memory_space<semaphore_mem>> -> memref<1x!tpu.dma_semaphore, #tpu.memory_space<semaphore_mem>>
    %15 = tpu.memref_squeeze %14 : memref<1x!tpu.dma_semaphore, #tpu.memory_space<semaphore_mem>> -> memref<!tpu.dma_semaphore, #tpu.memory_space<semaphore_mem>>
    tpu.wait_dma2 semaphore(%15 : memref<!tpu.dma_semaphore, #tpu.memory_space<semaphore_mem>>) src(%12 : memref<8x32xf32, #tpu.memory_space<any>>) dst(%13 : memref<8x32xf32, #tpu.memory_space<any>>)
    return
  }
}

</mosaic_0001>

<llo_original>
// kernel: tpu_custom_call.1
$region0: #{tpu_custom_call.1}
  #allocation0 [shape = 'u32[]', space=smem, size = 0x4, offset = 0x4, fixed_abs, tag = 'smem constant byte address 0x4 - core index']
  #allocation1 [shape = 'u32[144,128]{1,0:T(1,128)}', space=vmem, size = 0x12000, scoped, tag = 'internal scratch']
  #allocation2 [shape = 's32[2]{0}', space=sflag, size = 0x8, scoped, tag = 'scratch operand']
  #allocation3 [shape = 's32[]', space=sflag, size = 0x4, offset = 0, fixed_abs, tag = 'sflag constant byte address 0x0 - dummy sync flag']
  #allocation4 [shape = 'u32[0]{0}', space=smem, size = 0, offset = 0, fixed_abs, tag = 'smem constant byte address 0x0 - null']
  #allocation5 [shape = 's32[]', space=sflag, size = 0x4, offset = 0, fixed_abs, tag = 'sflag constant byte address 0x0 - dummy sync flag']
  #allocation6 [shape = 'u32[0]{0}', space=smem, size = 0, offset = 0, fixed_abs, tag = 'smem constant byte address 0x0 - null']
  %s0 = inlined_call_operand.hbm [shape: f32[16,32], index: 0, kind: input, shape index: {}]
  %s1 = inlined_call_operand.hbm [shape: f32[16,32], index: 1, kind: output, shape index: {}]
  %s2 = sld [smem:[#allocation0]]
  $region2: #{tpu_custom_call.1} parent=0
    _
  %s4 = ssub.s32 1, %s2
  %s5 = scalar_select 0, %s4, %s2
  %s7 = sshll.u32 1, 14
  %s8 = sxor.u32 4294967295, %s7
  %s11 = sshll.u32 3, 24
  %s12 = sxor.u32 4294967295, %s11
  %s13 = sand.u32 0, %s12
  %s15 = sor.u32 %s13, 0
  %18 = dma.general %s0, 128, %s1, [#allocation2], [#allocation3], [#allocation4], %s15, 0
  %s19 = scalar_lea.hbm %s0, 128
  %s20 = scalar_lea.hbm %s1, 128
  %s21 = scalar_lea.sflag [#allocation2], 1
  %s23 = sshll.u32 1, 14
  %s24 = sxor.u32 4294967295, %s23
  %s27 = sshll.u32 3, 24
  %s28 = sxor.u32 4294967295, %s27
  %s29 = sand.u32 0, %s28
  %s31 = sor.u32 %s29, 0
  %34 = dma.general %s19, 128, %s20, %s21, [#allocation5], [#allocation6], %s31, 0
  %s35 = smul.u32 8, 1
  %s36 = sshll.u32 %s35, 4
  %37 = dma.done [#allocation2], %s36
  %s38 = sshll.u32 %s35, 4
  %39 = dma.done %s21, %s38
  %40 = vsyncmov [#allocation2]
  %s41 = vpop.sfrf %40
  %p42 = scmp.eq.s32.totalorder %s41, 0
  %p43 = pneg %p42
  %45 = shalt.err (%p43)
  %s46 = scalar_lea.sflag [#allocation2], 1
  %47 = vsyncmov %s46
  %s48 = vpop.sfrf %47
  %p49 = scmp.eq.s32.totalorder %s48, 0
  %p50 = pneg %p49
  %52 = shalt.err (%p50)

</llo_original>
